<compile_context>
chip_gen: v5e
topology: v5e:2x2
jax: 0.10.0
libtpu: 0.0.40
codegen_flags: <defaults>
</compile_context>

<pallas_src>
import functools

import numpy as np

import jax
import jax.numpy as jnp
from jax.experimental import pallas as pl
from jax.experimental.pallas import tpu as pltpu


# ---------------------------------------------------------------------------
# Fused kernel: evaluate all candidate crops, pick the first valid trial,
# emit the chosen crop params and the transformed boxes in one launch.
#   boxes : (N, 4) xyxy                     (boxes along sublanes)
#   crops : (4, Tp) rows l, t, r, b         (trials along lanes, lane-padded)
#   meta  : (2, Tp) row 0 = ar_ok & nondegen pre-mask, row 1 = min_jaccard
# outputs:
#   params    : (1, 8) int32  [top, left, new_h, new_w, applied, 0, 0, 0]
#   boxes_out : (N, 4) f32    translated / clamped / zeroed boxes
# ---------------------------------------------------------------------------
def _select_and_boxes_kernel(H, W, boxes_ref, crops_ref, meta_ref,
                             params_ref, boxes_out_ref):
    bx = boxes_ref[...]                       # (N, 4)
    x1 = bx[:, 0:1]
    y1 = bx[:, 1:2]
    x2 = bx[:, 2:3]
    y2 = bx[:, 3:4]

    c = crops_ref[...]                        # (4, Tp)
    l = c[0:1, :]
    t = c[1:2, :]
    r = c[2:3, :]
    b = c[3:4, :]

    cx = 0.5 * (x1 + x2)                      # (N, 1)
    cy = 0.5 * (y1 + y2)

    within = (l < cx) & (cx < r) & (t < cy) & (cy < b)          # (N, Tp)

    # torchvision box_iou(box, crop) -- exact division (threshold comparison).
    ix1 = jnp.maximum(x1, l)
    iy1 = jnp.maximum(y1, t)
    ix2 = jnp.minimum(x2, r)
    iy2 = jnp.minimum(y2, b)
    inter = jnp.maximum(ix2 - ix1, 0.0) * jnp.maximum(iy2 - iy1, 0.0)   # (N, Tp)
    area_box = (x2 - x1) * (y2 - y1)                                     # (N, 1)
    area_crop = (r - l) * (b - t)                                        # (1, Tp)
    iou = inter / (area_box + area_crop - inter)

    # Mask BEFORE the max so 0/0 NaN of degenerate/padded crops never enters
    # the reduction (within is False there).
    any_within = jnp.max(within.astype(jnp.float32), axis=0, keepdims=True)  # (1, Tp)
    max_iou = jnp.max(jnp.where(within, iou, -1.0), axis=0, keepdims=True)   # (1, Tp)

    ar_ok = meta_ref[0:1, :]                  # (1, Tp)  aspect-ratio & nondegenerate
    min_j = meta_ref[1:2, 0:1]                # (1, 1)   jaccard threshold

    valid = (ar_ok > 0.0) & (any_within > 0.0) & (max_iou >= min_j)          # (1, Tp)

    Tp = valid.shape[1]
    lane = jax.lax.broadcasted_iota(jnp.int32, valid.shape, 1)               # (1, Tp)
    ti = jnp.min(jnp.where(valid, lane, Tp), axis=1, keepdims=True)          # (1, 1)
    any_valid = ti < Tp                                                      # (1, 1)

    # Gather the chosen trial's l,t,r,b via a one-hot lane mask + reduce.
    onehot = lane == ti                                                      # (1, Tp)
    sel = jnp.sum(jnp.where(onehot, c, 0.0), axis=1, keepdims=True)          # (4, 1)
    sl = sel[0:1, :]
    st = sel[1:2, :]
    sr = sel[2:3, :]
    sb = sel[3:4, :]

    # Identity-crop fallback [0, 0, H, W] when no trial succeeds -> the image
    # kernel becomes an exact pass-through (relied upon; do not change).
    top_f = jnp.where(any_valid, st, 0.0)
    left_f = jnp.where(any_valid, sl, 0.0)
    new_h_f = jnp.where(any_valid, sb - st, float(H))
    new_w_f = jnp.where(any_valid, sr - sl, float(W))
    applied_f = any_valid.astype(jnp.float32)

    pcol = jax.lax.broadcasted_iota(jnp.int32, (1, 8), 1)
    vals = (jnp.where(pcol == 0, top_f, 0.0)
            + jnp.where(pcol == 1, left_f, 0.0)
            + jnp.where(pcol == 2, new_h_f, 0.0)
            + jnp.where(pcol == 3, new_w_f, 0.0)
            + jnp.where(pcol == 4, applied_f, 0.0))
    params_ref[...] = vals.astype(jnp.int32)

    # Box transform: translate by (-left, -top), clamp to the crop canvas,
    # zero boxes whose center is outside the chosen crop.
    right_f = left_f + new_w_f
    bottom_f = top_f + new_h_f
    win = (left_f < cx) & (cx < right_f) & (top_f < cy) & (cy < bottom_f)    # (N, 1)

    col = jax.lax.broadcasted_iota(jnp.int32, bx.shape, 1)                   # (N, 4)
    is_x = (col % 2) == 0
    shift = jnp.where(is_x, left_f, top_f)
    hi = jnp.where(is_x, new_w_f, new_h_f)
    transformed = jnp.clip(bx - shift, 0.0, hi)
    transformed = jnp.where(win, transformed, 0.0)

    boxes_out_ref[...] = jnp.where(applied_f > 0.0, transformed, bx)


def select_and_boxes(boxes_f, crops_t, meta, H, W):
    """boxes_f: (N,4) f32, crops_t: (4,Tp) f32, meta: (2,Tp) f32."""
    N = boxes_f.shape[0]
    return pl.pallas_call(
        functools.partial(_select_and_boxes_kernel, H, W),
        out_shape=(
            jax.ShapeDtypeStruct((1, 8), jnp.int32),
            jax.ShapeDtypeStruct((N, 4), jnp.float32),
        ),
    )(boxes_f, crops_t, meta)


# ---------------------------------------------------------------------------
# Image crop kernel: out[c, r, w] = img[c, r + top, w + left] for r < new_h,
# w < new_w else 0, realised as dynamic sublane/lane rolls + iota mask.
# params (scalar-prefetched to SMEM): [top, left, new_h, new_w, applied, ...]
# ---------------------------------------------------------------------------
def _crop_image_kernel(params_ref, img_ref, out_ref):
    top = params_ref[0]
    left = params_ref[1]
    new_h = params_ref[2]
    new_w = params_ref[3]

    H = img_ref.shape[1]
    W = img_ref.shape[2]
    img = img_ref[0]                                          # (H, W)

    # jnp.roll convention: out[i] = x[(i - shift) mod n]; we want out[r] = x[r+top]
    shifted = pltpu.roll(img, shift=(H - top) % H, axis=0)
    shifted = pltpu.roll(shifted, shift=(W - left) % W, axis=1)

    rr = jax.lax.broadcasted_iota(jnp.int32, (H, W), 0)
    cc = jax.lax.broadcasted_iota(jnp.int32, (H, W), 1)
    keep = (rr < new_h) & (cc < new_w)
    out_ref[0] = jnp.where(keep, shifted, 0.0).astype(out_ref.dtype)


def crop_image(params_vec_i32, image_chw):
    C, H, W = image_chw.shape
    grid_spec = pltpu.PrefetchScalarGridSpec(
        num_scalar_prefetch=1,
        grid=(C,),
        in_specs=[pl.BlockSpec((1, H, W), lambda c, p: (c, 0, 0))],
        out_specs=pl.BlockSpec((1, H, W), lambda c, p: (c, 0, 0)),
    )
    nbytes = 2 * C * H * W * 4
    return pl.pallas_call(
        _crop_image_kernel,
        out_shape=jax.ShapeDtypeStruct((C, H, W), image_chw.dtype),
        grid_spec=grid_spec,
        compiler_params=pltpu.CompilerParams(
            dimension_semantics=("parallel",)),      # image-only output: safe on v7x 2-TC
        cost_estimate=pl.CostEstimate(
            flops=3 * C * H * W, transcendentals=0, bytes_accessed=nbytes),
    )(params_vec_i32, image_chw)


# ---------------------------------------------------------------------------
# Module-level wrapper mirroring torchvision RandomIoUCrop.
# ---------------------------------------------------------------------------
class RandomIoUCropPallas:
    def __init__(self, min_scale=0.3, max_scale=1.0, min_aspect_ratio=0.5,
                 max_aspect_ratio=2.0, sampler_options=None, trials=40, p=0.8,
                 host_seed=0):
        self.min_scale = min_scale
        self.max_scale = max_scale
        self.min_aspect_ratio = min_aspect_ratio
        self.max_aspect_ratio = max_aspect_ratio
        self.options = [0.0, 0.1, 0.3, 0.5, 0.7, 0.9, 1.0] if sampler_options is None else sampler_options
        self.trials = trials
        self.p = p
        # Host-side RNG for the scalar branches (p-gate, jaccard option draw):
        # mirrors PyTorch's scalar control flow with zero device->host syncs.
        self._host_rng = np.random.default_rng(host_seed)
        # Entire trial-generation -> selection -> crop pipeline stays on device.
        self._crop_fn = jax.jit(self._device_crop)

    def _device_crop(self, key, image, boxes, min_jaccard):
        C, H, W = image.shape
        T = self.trials
        T_pad = ((T + 127) // 128) * 128          # lane-align the trial axis
        pad = T_pad - T
        k_scale, k_pos = jax.random.split(key, 2)

        r = self.min_scale + (self.max_scale - self.min_scale) * jax.random.uniform(k_scale, (T, 2))
        new_w = (W * r[:, 0]).astype(jnp.int32)              # int() truncation
        new_h = (H * r[:, 1]).astype(jnp.int32)
        aspect = new_w.astype(jnp.float32) / jnp.maximum(new_h, 1).astype(jnp.float32)
        ar_ok = (aspect >= self.min_aspect_ratio) & (aspect <= self.max_aspect_ratio)

        rp = jax.random.uniform(k_pos, (T, 2))
        left = ((W - new_w).astype(jnp.float32) * rp[:, 0]).astype(jnp.int32)
        top = ((H - new_h).astype(jnp.float32) * rp[:, 1]).astype(jnp.int32)
        right = left + new_w
        bottom = top + new_h
        nondegen = (left != right) & (top != bottom)

        crops_t = jnp.stack([left, top, right, bottom], axis=0).astype(jnp.float32)  # (4, T)
        crops_t = jnp.pad(crops_t, ((0, 0), (0, pad)))                               # (4, T_pad)
        pre_mask = jnp.pad((ar_ok & nondegen).astype(jnp.float32), (0, pad))         # (T_pad,)
        meta = jnp.stack(
            [pre_mask, jnp.full((T_pad,), min_jaccard, dtype=jnp.float32)], axis=0)  # (2, T_pad)

        boxes_f = boxes.astype(jnp.float32)                                          # (N, 4)

        # ---- Pallas kernel 1 (fused): trial eval + selection + box transform ----
        params2d, out_boxes = select_and_boxes(boxes_f, crops_t, meta, H, W)
        params_vec = params2d[0]          # (8,) [top, left, new_h, new_w, applied, ...]

        # ---- Pallas kernel 2: crop the image (roll + mask, channels parallel) ----
        out_img = crop_image(params_vec, image)
        return out_img, out_boxes.astype(boxes.dtype), params_vec

    def __call__(self, key, image_chw, boxes_xyxy):
        C, H, W = image_chw.shape

        # forward(): torch.rand(1) >= p  ->  identity (host RNG, no device sync)
        if self._host_rng.random() >= self.p:
            return image_chw, boxes_xyxy, (H, W), False

        # _get_params(): draw one jaccard option (host RNG, no device sync)
        idx = int(self._host_rng.integers(0, len(self.options)))
        min_jaccard = float(self.options[idx])
        if min_jaccard >= 1.0:
            return image_chw, boxes_xyxy, (H, W), False

        out_img, out_boxes, params = self._crop_fn(key, image_chw, boxes_xyxy, min_jaccard)
        # params = [top, left, new_h, new_w, applied, ...] (device scalars; no host sync)
        return out_img, out_boxes, (params[2], params[3]), params[4]


if __name__ == "__main__":
    key = jax.random.PRNGKey(0)
    k_img, k_ctr, k_half, k_call = jax.random.split(key, 4)

    C, H, W, N = 3, 128, 128, 8
    image = jax.random.uniform(k_img, (C, H, W), dtype=jnp.float32)

    centers = jax.random.uniform(k_ctr, (N, 2), minval=16.0, maxval=112.0)
    halves = jax.random.uniform(k_half, (N, 2), minval=4.0, maxval=24.0)
    boxes = jnp.concatenate([centers - halves, centers + halves], axis=1)
    boxes = jnp.clip(boxes, 0.0, float(W)).astype(jnp.float32)   # (N, 4) xyxy

    # p=1.0 and jaccard options < 1.0 so the demo deterministically exercises
    # both Pallas kernels (class defaults match the PyTorch module).
    transform = RandomIoUCropPallas(sampler_options=[0.0, 0.1, 0.3], p=1.0)
    out_img, out_boxes, (nh, nw), applied = transform(k_call, image, boxes)

    jax.block_until_ready(out_img)
    jax.block_until_ready(out_boxes)
    print("KERNEL_OK")
</pallas_src>

<mosaic_0001>
module attributes {stable_mosaic.version = 11 : i64} {
  func.func @_crop_image_kernel(%arg0: i32, %arg1: memref<8xi32, #tpu.memory_space<smem>>, %arg2: memref<1x128x128xf32, #tpu.memory_space<vmem>>, %arg3: memref<1x128x128xf32, #tpu.memory_space<vmem>>) attributes {dimension_semantics = [#tpu.dimension_semantics<parallel>], iteration_bounds = array<i64: 3>, scalar_prefetch = 1 : i64, scratch_operands = 0 : i64, tpu.core_type = #tpu.core_type<tc>, window_params = [{transform_indices = @transform_0, window_bounds = array<i64: 1, 128, 128>}, {transform_indices = @transform_1, window_bounds = array<i64: 1, 128, 128>}]} {
    %c0 = arith.constant 0 : index
    %0 = memref.load %arg1[%c0] : memref<8xi32, #tpu.memory_space<smem>>
    %c1 = arith.constant 1 : index
    %1 = memref.load %arg1[%c1] : memref<8xi32, #tpu.memory_space<smem>>
    %c2 = arith.constant 2 : index
    %2 = memref.load %arg1[%c2] : memref<8xi32, #tpu.memory_space<smem>>
    %c3 = arith.constant 3 : index
    %3 = memref.load %arg1[%c3] : memref<8xi32, #tpu.memory_space<smem>>
    %c0_0 = arith.constant 0 : index
    %c0_1 = arith.constant 0 : index
    %c0_2 = arith.constant 0 : index
    %4 = vector.load %arg2[%c0_0, %c0_1, %c0_2] : memref<1x128x128xf32, #tpu.memory_space<vmem>>, vector<1x128x128xf32>
    %5 = vector.shape_cast %4 : vector<1x128x128xf32> to vector<128x128xf32>
    %c128_i32 = arith.constant 128 : i32
    %6 = arith.subi %c128_i32, %0 : i32
    %c128_i32_3 = arith.constant 128 : i32
    %c0_i32 = arith.constant 0 : i32
    %7 = arith.cmpi eq, %c128_i32_3, %c0_i32 : i32
    %c1_i32 = arith.constant 1 : i32
    %8 = arith.select %7, %c1_i32, %c128_i32_3 : i32
    %9 = arith.remsi %6, %8 : i32
    %c0_i32_4 = arith.constant 0 : i32
    %10 = arith.cmpi ne, %9, %c0_i32_4 : i32
    %c0_i32_5 = arith.constant 0 : i32
    %11 = arith.cmpi slt, %9, %c0_i32_5 : i32
    %c0_i32_6 = arith.constant 0 : i32
    %12 = arith.cmpi slt, %8, %c0_i32_6 : i32
    %13 = arith.xori %11, %12 : i1
    %14 = arith.andi %13, %10 : i1
    %15 = arith.addi %9, %8 : i32
    %16 = arith.select %14, %15, %9 : i32
    %17 = tpu.dynamic_rotate %5 by %16 dim 0 : vector<128x128xf32>, i32 -> vector<128x128xf32>
    %c128_i32_7 = arith.constant 128 : i32
    %18 = arith.subi %c128_i32_7, %1 : i32
    %c128_i32_8 = arith.constant 128 : i32
    %c0_i32_9 = arith.constant 0 : i32
    %19 = arith.cmpi eq, %c128_i32_8, %c0_i32_9 : i32
    %c1_i32_10 = arith.constant 1 : i32
    %20 = arith.select %19, %c1_i32_10, %c128_i32_8 : i32
    %21 = arith.remsi %18, %20 : i32
    %c0_i32_11 = arith.constant 0 : i32
    %22 = arith.cmpi ne, %21, %c0_i32_11 : i32
    %c0_i32_12 = arith.constant 0 : i32
    %23 = arith.cmpi slt, %21, %c0_i32_12 : i32
    %c0_i32_13 = arith.constant 0 : i32
    %24 = arith.cmpi slt, %20, %c0_i32_13 : i32
    %25 = arith.xori %23, %24 : i1
    %26 = arith.andi %25, %22 : i1
    %27 = arith.addi %21, %20 : i32
    %28 = arith.select %26, %27, %21 : i32
    %29 = tpu.dynamic_rotate %17 by %28 dim 1 : vector<128x128xf32>, i32 -> vector<128x128xf32>
    %30 = tpu.iota {dimensions = array<i32: 0>} : vector<128x128xi32>
    %31 = tpu.iota {dimensions = array<i32: 1>} : vector<128x128xi32>
    %32 = vector.broadcast %2 : i32 to vector<128x128xi32>
    %33 = arith.cmpi slt, %30, %32 : vector<128x128xi32>
    %34 = vector.broadcast %3 : i32 to vector<128x128xi32>
    %35 = arith.cmpi slt, %31, %34 : vector<128x128xi32>
    %36 = arith.andi %33, %35 : vector<128x128xi1>
    %cst = arith.constant 0.000000e+00 : f32
    %37 = vector.broadcast %cst : f32 to vector<128x128xf32>
    %38 = arith.select %36, %29, %37 : vector<128x128xi1>, vector<128x128xf32>
    %c0_14 = arith.constant 0 : index
    %c0_15 = arith.constant 0 : index
    %c0_16 = arith.constant 0 : index
    %39 = vector.load %arg3[%c0_14, %c0_15, %c0_16] : memref<1x128x128xf32, #tpu.memory_space<vmem>>, vector<1x128x128xf32>
    %40 = vector.shape_cast %39 : vector<1x128x128xf32> to vector<128x128xf32>
    %41 = vector.shape_cast %38 : vector<128x128xf32> to vector<1x128x128xf32>
    tpu.vector_store %arg3[%c0_14, %c0_15, %c0_16], %41 {strides = array<i32>} : memref<1x128x128xf32, #tpu.memory_space<vmem>>, vector<1x128x128xf32>,
    return
  }
  func.func @transform_0(%arg0: i32, %arg1: memref<8xi32, #tpu.memory_space<smem>>) -> (i32, i32, i32) {
    %c0_i32 = arith.constant 0 : i32
    %c0_i32_0 = arith.constant 0 : i32
    %c0_i32_1 = arith.constant 0 : i32
    return %arg0, %c0_i32, %c0_i32_0 : i32, i32, i32
  }
  func.func @transform_1(%arg0: i32, %arg1: memref<8xi32, #tpu.memory_space<smem>>) -> (i32, i32, i32) {
    %c0_i32 = arith.constant 0 : i32
    %c0_i32_0 = arith.constant 0 : i32
    %c0_i32_1 = arith.constant 0 : i32
    return %arg0, %c0_i32, %c0_i32_0 : i32, i32, i32
  }
}

module attributes {stable_mosaic.version = 11 : i64} {
  func.func @_select_and_boxes_kernel(%arg0: memref<8x4xf32, #tpu.memory_space<vmem>>, %arg1: memref<4x128xf32, #tpu.memory_space<vmem>>, %arg2: memref<2x128xf32, #tpu.memory_space<vmem>>, %arg3: memref<1x8xi32, #tpu.memory_space<vmem>>, %arg4: memref<8x4xf32, #tpu.memory_space<vmem>>) attributes {dimension_semantics = [], scalar_prefetch = 0 : i64, scratch_operands = 0 : i64, tpu.core_type = #tpu.core_type<tc>} {
    %c0 = arith.constant 0 : index
    %c0_0 = arith.constant 0 : index
    %0 = vector.load %arg0[%c0, %c0_0] : memref<8x4xf32, #tpu.memory_space<vmem>>, vector<8x4xf32>
    %1 = vector.extract_strided_slice %0 {offsets = [0, 0], sizes = [8, 1], strides = [1, 1]} : vector<8x4xf32> to vector<8x1xf32>
    %2 = vector.extract_strided_slice %0 {offsets = [0, 1], sizes = [8, 1], strides = [1, 1]} : vector<8x4xf32> to vector<8x1xf32>
    %3 = vector.extract_strided_slice %0 {offsets = [0, 2], sizes = [8, 1], strides = [1, 1]} : vector<8x4xf32> to vector<8x1xf32>
    %4 = vector.extract_strided_slice %0 {offsets = [0, 3], sizes = [8, 1], strides = [1, 1]} : vector<8x4xf32> to vector<8x1xf32>
    %c0_1 = arith.constant 0 : index
    %c0_2 = arith.constant 0 : index
    %5 = vector.load %arg1[%c0_1, %c0_2] : memref<4x128xf32, #tpu.memory_space<vmem>>, vector<4x128xf32>
    %6 = vector.extract_strided_slice %5 {offsets = [0, 0], sizes = [1, 128], strides = [1, 1]} : vector<4x128xf32> to vector<1x128xf32>
    %7 = vector.extract_strided_slice %5 {offsets = [1, 0], sizes = [1, 128], strides = [1, 1]} : vector<4x128xf32> to vector<1x128xf32>
    %8 = vector.extract_strided_slice %5 {offsets = [2, 0], sizes = [1, 128], strides = [1, 1]} : vector<4x128xf32> to vector<1x128xf32>
    %9 = vector.extract_strided_slice %5 {offsets = [3, 0], sizes = [1, 128], strides = [1, 1]} : vector<4x128xf32> to vector<1x128xf32>
    %10 = arith.addf %1, %3 : vector<8x1xf32>
    %cst = arith.constant 5.000000e-01 : f32
    %11 = vector.broadcast %cst : f32 to vector<8x1xf32>
    %12 = arith.mulf %11, %10 : vector<8x1xf32>
    %13 = arith.addf %2, %4 : vector<8x1xf32>
    %cst_3 = arith.constant 5.000000e-01 : f32
    %14 = vector.broadcast %cst_3 : f32 to vector<8x1xf32>
    %15 = arith.mulf %14, %13 : vector<8x1xf32>
    %16 = vector.broadcast %6 : vector<1x128xf32> to vector<8x128xf32>
    %17 = vector.broadcast %12 : vector<8x1xf32> to vector<8x128xf32>
    %18 = arith.cmpf olt, %16, %17 : vector<8x128xf32>
    %19 = vector.broadcast %12 : vector<8x1xf32> to vector<8x128xf32>
    %20 = vector.broadcast %8 : vector<1x128xf32> to vector<8x128xf32>
    %21 = arith.cmpf olt, %19, %20 : vector<8x128xf32>
    %22 = arith.andi %18, %21 : vector<8x128xi1>
    %23 = vector.broadcast %7 : vector<1x128xf32> to vector<8x128xf32>
    %24 = vector.broadcast %15 : vector<8x1xf32> to vector<8x128xf32>
    %25 = arith.cmpf olt, %23, %24 : vector<8x128xf32>
    %26 = arith.andi %22, %25 : vector<8x128xi1>
    %27 = vector.broadcast %15 : vector<8x1xf32> to vector<8x128xf32>
    %28 = vector.broadcast %9 : vector<1x128xf32> to vector<8x128xf32>
    %29 = arith.cmpf olt, %27, %28 : vector<8x128xf32>
    %30 = arith.andi %26, %29 : vector<8x128xi1>
    %31 = vector.broadcast %1 : vector<8x1xf32> to vector<8x128xf32>
    %32 = vector.broadcast %6 : vector<1x128xf32> to vector<8x128xf32>
    %33 = arith.maximumf %31, %32 : vector<8x128xf32>
    %34 = vector.broadcast %2 : vector<8x1xf32> to vector<8x128xf32>
    %35 = vector.broadcast %7 : vector<1x128xf32> to vector<8x128xf32>
    %36 = arith.maximumf %34, %35 : vector<8x128xf32>
    %37 = vector.broadcast %3 : vector<8x1xf32> to vector<8x128xf32>
    %38 = vector.broadcast %8 : vector<1x128xf32> to vector<8x128xf32>
    %39 = arith.minimumf %37, %38 : vector<8x128xf32>
    %40 = vector.broadcast %4 : vector<8x1xf32> to vector<8x128xf32>
    %41 = vector.broadcast %9 : vector<1x128xf32> to vector<8x128xf32>
    %42 = arith.minimumf %40, %41 : vector<8x128xf32>
    %43 = arith.subf %39, %33 : vector<8x128xf32>
    %cst_4 = arith.constant 0.000000e+00 : f32
    %44 = vector.broadcast %cst_4 : f32 to vector<8x128xf32>
    %45 = arith.maximumf %43, %44 : vector<8x128xf32>
    %46 = arith.subf %42, %36 : vector<8x128xf32>
    %cst_5 = arith.constant 0.000000e+00 : f32
    %47 = vector.broadcast %cst_5 : f32 to vector<8x128xf32>
    %48 = arith.maximumf %46, %47 : vector<8x128xf32>
    %49 = arith.mulf %45, %48 : vector<8x128xf32>
    %50 = arith.subf %3, %1 : vector<8x1xf32>
    %51 = arith.subf %4, %2 : vector<8x1xf32>
    %52 = arith.mulf %50, %51 : vector<8x1xf32>
    %53 = arith.subf %8, %6 : vector<1x128xf32>
    %54 = arith.subf %9, %7 : vector<1x128xf32>
    %55 = arith.mulf %53, %54 : vector<1x128xf32>
    %56 = vector.broadcast %52 : vector<8x1xf32> to vector<8x128xf32>
    %57 = vector.broadcast %55 : vector<1x128xf32> to vector<8x128xf32>
    %58 = arith.addf %56, %57 : vector<8x128xf32>
    %59 = arith.subf %58, %49 : vector<8x128xf32>
    %60 = arith.divf %49, %59 : vector<8x128xf32>
    %61 = arith.extui %30 : vector<8x128xi1> to vector<8x128xi32>
    %62 = arith.sitofp %61 : vector<8x128xi32> to vector<8x128xf32>
    %cst_6 = arith.constant dense<0xFF800000> : vector<128xf32>
    %63 = vector.multi_reduction <maximumf>, %62, %cst_6 [0] : vector<8x128xf32> to vector<128xf32>
    %64 = vector.shape_cast %63 : vector<128xf32> to vector<1x128xf32>
    %cst_7 = arith.constant -1.000000e+00 : f32
    %65 = vector.broadcast %cst_7 : f32 to vector<8x128xf32>
    %66 = arith.select %30, %60, %65 : vector<8x128xi1>, vector<8x128xf32>
    %cst_8 = arith.constant dense<0xFF800000> : vector<128xf32>
    %67 = vector.multi_reduction <maximumf>, %66, %cst_8 [0] : vector<8x128xf32> to vector<128xf32>
    %68 = vector.shape_cast %67 : vector<128xf32> to vector<1x128xf32>
    %c0_9 = arith.constant 0 : index
    %c0_10 = arith.constant 0 : index
    %69 = vector.load %arg2[%c0_9, %c0_10] : memref<2x128xf32, #tpu.memory_space<vmem>>, vector<1x128xf32>
    %c1 = arith.constant 1 : index
    %c0_11 = arith.constant 0 : index
    %70 = vector.load %arg2[%c1, %c0_11] : memref<2x128xf32, #tpu.memory_space<vmem>>, vector<1x1xf32>
    %cst_12 = arith.constant 0.000000e+00 : f32
    %71 = vector.broadcast %cst_12 : f32 to vector<1x128xf32>
    %72 = arith.cmpf ogt, %69, %71 : vector<1x128xf32>
    %cst_13 = arith.constant 0.000000e+00 : f32
    %73 = vector.broadcast %cst_13 : f32 to vector<1x128xf32>
    %74 = arith.cmpf ogt, %64, %73 : vector<1x128xf32>
    %75 = arith.andi %72, %74 : vector<1x128xi1>
    %76 = vector.broadcast %70 : vector<1x1xf32> to vector<1x128xf32>
    %77 = arith.cmpf oge, %68, %76 : vector<1x128xf32>
    %78 = arith.andi %75, %77 : vector<1x128xi1>
    %79 = tpu.iota {dimensions = array<i32: 1>} : vector<1x128xi32>
    %c128_i32 = arith.constant 128 : i32
    %80 = vector.broadcast %c128_i32 : i32 to vector<1x128xi32>
    %81 = arith.select %78, %79, %80 : vector<1x128xi1>, vector<1x128xi32>
    %cst_14 = arith.constant dense<2147483647> : vector<1xi32>
    %82 = vector.multi_reduction <minsi>, %81, %cst_14 [1] : vector<1x128xi32> to vector<1xi32>
    %83 = vector.shape_cast %82 : vector<1xi32> to vector<1x1xi32>
    %c128_i32_15 = arith.constant 128 : i32
    %84 = vector.broadcast %c128_i32_15 : i32 to vector<1x1xi32>
    %85 = arith.cmpi slt, %83, %84 : vector<1x1xi32>
    %86 = vector.broadcast %83 : vector<1x1xi32> to vector<1x128xi32>
    %87 = arith.cmpi eq, %79, %86 : vector<1x128xi32>
    %cst_16 = arith.constant 0.000000e+00 : f32
    %88 = vector.shape_cast %87 : vector<1x128xi1> to vector<1x128xi1>
    %89 = vector.broadcast %88 : vector<1x128xi1> to vector<4x128xi1>
    %90 = vector.broadcast %cst_16 : f32 to vector<4x128xf32>
    %91 = arith.select %89, %5, %90 : vector<4x128xi1>, vector<4x128xf32>
    %cst_17 = arith.constant dense<0.000000e+00> : vector<4xf32>
    %92 = vector.multi_reduction <add>, %91, %cst_17 [1] : vector<4x128xf32> to vector<4xf32>
    %93 = vector.shape_cast %92 : vector<4xf32> to vector<4x1xf32>
    %94 = vector.extract_strided_slice %93 {offsets = [0, 0], sizes = [1, 1], strides = [1, 1]} : vector<4x1xf32> to vector<1x1xf32>
    %95 = vector.extract_strided_slice %93 {offsets = [1, 0], sizes = [1, 1], strides = [1, 1]} : vector<4x1xf32> to vector<1x1xf32>
    %96 = vector.extract_strided_slice %93 {offsets = [2, 0], sizes = [1, 1], strides = [1, 1]} : vector<4x1xf32> to vector<1x1xf32>
    %97 = vector.extract_strided_slice %93 {offsets = [3, 0], sizes = [1, 1], strides = [1, 1]} : vector<4x1xf32> to vector<1x1xf32>
    %cst_18 = arith.constant 0.000000e+00 : f32
    %98 = vector.broadcast %cst_18 : f32 to vector<1x1xf32>
    %99 = arith.select %85, %95, %98 : vector<1x1xi1>, vector<1x1xf32>
    %cst_19 = arith.constant 0.000000e+00 : f32
    %100 = vector.broadcast %cst_19 : f32 to vector<1x1xf32>
    %101 = arith.select %85, %94, %100 : vector<1x1xi1>, vector<1x1xf32>
    %102 = arith.subf %97, %95 : vector<1x1xf32>
    %cst_20 = arith.constant 1.280000e+02 : f32
    %103 = vector.broadcast %cst_20 : f32 to vector<1x1xf32>
    %104 = arith.select %85, %102, %103 : vector<1x1xi1>, vector<1x1xf32>
    %105 = arith.subf %96, %94 : vector<1x1xf32>
    %cst_21 = arith.constant 1.280000e+02 : f32
    %106 = vector.broadcast %cst_21 : f32 to vector<1x1xf32>
    %107 = arith.select %85, %105, %106 : vector<1x1xi1>, vector<1x1xf32>
    %108 = arith.extui %85 : vector<1x1xi1> to vector<1x1xi32>
    %109 = arith.sitofp %108 : vector<1x1xi32> to vector<1x1xf32>
    %110 = tpu.iota {dimensions = array<i32: 1>} : vector<1x8xi32>
    %c0_i32 = arith.constant 0 : i32
    %111 = vector.broadcast %c0_i32 : i32 to vector<1x8xi32>
    %112 = arith.cmpi eq, %110, %111 : vector<1x8xi32>
    %cst_22 = arith.constant 0.000000e+00 : f32
    %113 = vector.shape_cast %99 : vector<1x1xf32> to vector<1x1xf32>
    %114 = vector.broadcast %113 : vector<1x1xf32> to vector<1x8xf32>
    %115 = vector.broadcast %cst_22 : f32 to vector<1x8xf32>
    %116 = arith.select %112, %114, %115 : vector<1x8xi1>, vector<1x8xf32>
    %c1_i32 = arith.constant 1 : i32
    %117 = vector.broadcast %c1_i32 : i32 to vector<1x8xi32>
    %118 = arith.cmpi eq, %110, %117 : vector<1x8xi32>
    %cst_23 = arith.constant 0.000000e+00 : f32
    %119 = vector.shape_cast %101 : vector<1x1xf32> to vector<1x1xf32>
    %120 = vector.broadcast %119 : vector<1x1xf32> to vector<1x8xf32>
    %121 = vector.broadcast %cst_23 : f32 to vector<1x8xf32>
    %122 = arith.select %118, %120, %121 : vector<1x8xi1>, vector<1x8xf32>
    %123 = arith.addf %116, %122 : vector<1x8xf32>
    %c2_i32 = arith.constant 2 : i32
    %124 = vector.broadcast %c2_i32 : i32 to vector<1x8xi32>
    %125 = arith.cmpi eq, %110, %124 : vector<1x8xi32>
    %cst_24 = arith.constant 0.000000e+00 : f32
    %126 = vector.shape_cast %104 : vector<1x1xf32> to vector<1x1xf32>
    %127 = vector.broadcast %126 : vector<1x1xf32> to vector<1x8xf32>
    %128 = vector.broadcast %cst_24 : f32 to vector<1x8xf32>
    %129 = arith.select %125, %127, %128 : vector<1x8xi1>, vector<1x8xf32>
    %130 = arith.addf %123, %129 : vector<1x8xf32>
    %c3_i32 = arith.constant 3 : i32
    %131 = vector.broadcast %c3_i32 : i32 to vector<1x8xi32>
    %132 = arith.cmpi eq, %110, %131 : vector<1x8xi32>
    %cst_25 = arith.constant 0.000000e+00 : f32
    %133 = vector.shape_cast %107 : vector<1x1xf32> to vector<1x1xf32>
    %134 = vector.broadcast %133 : vector<1x1xf32> to vector<1x8xf32>
    %135 = vector.broadcast %cst_25 : f32 to vector<1x8xf32>
    %136 = arith.select %132, %134, %135 : vector<1x8xi1>, vector<1x8xf32>
    %137 = arith.addf %130, %136 : vector<1x8xf32>
    %c4_i32 = arith.constant 4 : i32
    %138 = vector.broadcast %c4_i32 : i32 to vector<1x8xi32>
    %139 = arith.cmpi eq, %110, %138 : vector<1x8xi32>
    %cst_26 = arith.constant 0.000000e+00 : f32
    %140 = vector.shape_cast %109 : vector<1x1xf32> to vector<1x1xf32>
    %141 = vector.broadcast %140 : vector<1x1xf32> to vector<1x8xf32>
    %142 = vector.broadcast %cst_26 : f32 to vector<1x8xf32>
    %143 = arith.select %139, %141, %142 : vector<1x8xi1>, vector<1x8xf32>
    %144 = arith.addf %137, %143 : vector<1x8xf32>
    %145 = arith.fptosi %144 : vector<1x8xf32> to vector<1x8xi32>
    %c0_27 = arith.constant 0 : index
    %c0_28 = arith.constant 0 : index
    %146 = vector.load %arg3[%c0_27, %c0_28] : memref<1x8xi32, #tpu.memory_space<vmem>>, vector<1x8xi32>
    tpu.vector_store %arg3[%c0_27, %c0_28], %145 {strides = array<i32>} : memref<1x8xi32, #tpu.memory_space<vmem>>, vector<1x8xi32>,
    %147 = arith.addf %101, %107 : vector<1x1xf32>
    %148 = arith.addf %99, %104 : vector<1x1xf32>
    %149 = vector.broadcast %101 : vector<1x1xf32> to vector<8x1xf32>
    %150 = arith.cmpf olt, %149, %12 : vector<8x1xf32>
    %151 = vector.broadcast %147 : vector<1x1xf32> to vector<8x1xf32>
    %152 = arith.cmpf olt, %12, %151 : vector<8x1xf32>
    %153 = arith.andi %150, %152 : vector<8x1xi1>
    %154 = vector.broadcast %99 : vector<1x1xf32> to vector<8x1xf32>
    %155 = arith.cmpf olt, %154, %15 : vector<8x1xf32>
    %156 = arith.andi %153, %155 : vector<8x1xi1>
    %157 = vector.broadcast %148 : vector<1x1xf32> to vector<8x1xf32>
    %158 = arith.cmpf olt, %15, %157 : vector<8x1xf32>
    %159 = arith.andi %156, %158 : vector<8x1xi1>
    %160 = tpu.iota {dimensions = array<i32: 1>} : vector<8x4xi32>
    %c2_i32_29 = arith.constant 2 : i32
    %c0_i32_30 = arith.constant 0 : i32
    %161 = arith.cmpi eq, %c2_i32_29, %c0_i32_30 : i32
    %c1_i32_31 = arith.constant 1 : i32
    %162 = arith.select %161, %c1_i32_31, %c2_i32_29 : i32
    %163 = vector.broadcast %162 : i32 to vector<8x4xi32>
    %164 = arith.remsi %160, %163 : vector<8x4xi32>
    %c0_i32_32 = arith.constant 0 : i32
    %165 = vector.broadcast %c0_i32_32 : i32 to vector<8x4xi32>
    %166 = arith.cmpi ne, %164, %165 : vector<8x4xi32>
    %c0_i32_33 = arith.constant 0 : i32
    %167 = vector.broadcast %c0_i32_33 : i32 to vector<8x4xi32>
    %168 = arith.cmpi slt, %164, %167 : vector<8x4xi32>
    %c0_i32_34 = arith.constant 0 : i32
    %169 = arith.cmpi slt, %162, %c0_i32_34 : i32
    %170 = vector.broadcast %169 : i1 to vector<8x4xi1>
    %171 = vector.broadcast %170 : vector<8x4xi1> to vector<8x4xi1>
    %172 = arith.xori %168, %171 : vector<8x4xi1>
    %173 = arith.andi %172, %166 : vector<8x4xi1>
    %174 = vector.broadcast %162 : i32 to vector<8x4xi32>
    %175 = arith.addi %164, %174 : vector<8x4xi32>
    %176 = arith.select %173, %175, %164 : vector<8x4xi1>, vector<8x4xi32>
    %c0_i32_35 = arith.constant 0 : i32
    %177 = vector.broadcast %c0_i32_35 : i32 to vector<8x4xi32>
    %178 = arith.cmpi eq, %176, %177 : vector<8x4xi32>
    %179 = vector.shape_cast %101 : vector<1x1xf32> to vector<1x1xf32>
    %180 = vector.broadcast %179 : vector<1x1xf32> to vector<8x4xf32>
    %181 = vector.shape_cast %99 : vector<1x1xf32> to vector<1x1xf32>
    %182 = vector.broadcast %181 : vector<1x1xf32> to vector<8x4xf32>
    %183 = arith.select %178, %180, %182 : vector<8x4xi1>, vector<8x4xf32>
    %184 = vector.shape_cast %107 : vector<1x1xf32> to vector<1x1xf32>
    %185 = vector.broadcast %184 : vector<1x1xf32> to vector<8x4xf32>
    %186 = vector.shape_cast %104 : vector<1x1xf32> to vector<1x1xf32>
    %187 = vector.broadcast %186 : vector<1x1xf32> to vector<8x4xf32>
    %188 = arith.select %178, %185, %187 : vector<8x4xi1>, vector<8x4xf32>
    %189 = arith.subf %0, %183 : vector<8x4xf32>
    %cst_36 = arith.constant 0.000000e+00 : f32
    %190 = vector.broadcast %cst_36 : f32 to vector<8x4xf32>
    %191 = arith.maximumf %190, %189 : vector<8x4xf32>
    %192 = arith.minimumf %188, %191 : vector<8x4xf32>
    %cst_37 = arith.constant 0.000000e+00 : f32
    %193 = vector.shape_cast %159 : vector<8x1xi1> to vector<8x1xi1>
    %194 = vector.broadcast %193 : vector<8x1xi1> to vector<8x4xi1>
    %195 = vector.broadcast %cst_37 : f32 to vector<8x4xf32>
    %196 = arith.select %194, %192, %195 : vector<8x4xi1>, vector<8x4xf32>
    %cst_38 = arith.constant 0.000000e+00 : f32
    %197 = vector.broadcast %cst_38 : f32 to vector<1x1xf32>
    %198 = arith.cmpf ogt, %109, %197 : vector<1x1xf32>
    %199 = vector.shape_cast %198 : vector<1x1xi1> to vector<1x1xi1>
    %200 = vector.broadcast %199 : vector<1x1xi1> to vector<8x4xi1>
    %201 = arith.select %200, %196, %0 : vector<8x4xi1>, vector<8x4xf32>
    %c0_39 = arith.constant 0 : index
    %c0_40 = arith.constant 0 : index
    %202 = vector.load %arg4[%c0_39, %c0_40] : memref<8x4xf32, #tpu.memory_space<vmem>>, vector<8x4xf32>
    tpu.vector_store %arg4[%c0_39, %c0_40], %201 {strides = array<i32>} : memref<8x4xf32, #tpu.memory_space<vmem>>, vector<8x4xf32>,
    return
  }
}

</mosaic_0001>

<llo_original>
// kernel: _device_crop.3
$region0: #{_device_crop.3}
  #allocation0 [shape = 'u32[]', space=smem, size = 0x4, offset = 0x4, fixed_abs, tag = 'smem constant byte address 0x4 - core index']
  #allocation1 [shape = 'u32[72,128]{1,0:T(1,128)}', space=vmem, size = 0x9000, scoped, tag = 'internal scratch']
  #allocation2 [shape = 's32[1]{0}', space=sflag, size = 0x4, scoped, tag = 'scoped memory for _device_crop.3']
  #allocation3 [shape = 'u8[512]{0}', space=smem, size = 0x200, scoped, tag = 'prefetched SMEM operand 0']
  %s0 = inlined_call_operand.vmem [shape: s32[8], index: 0, kind: input, shape index: {}]
  %s1 = inlined_call_operand.hbm [shape: f32[3,128,128], index: 1, kind: input, shape index: {}]
  %s2 = inlined_call_operand.hbm [shape: f32[3,128,128], index: 2, kind: output, shape index: {}]
  %s3 = sld [smem:[#allocation0]]
  $region41: #{_device_crop.3} parent=0
    _
  %s5 = ssub.s32 1, %s3
  %s6 = scalar_select 0, %s5, %s3
  %s8 = sshll.u32 %s0, 4
  %s9 = int_to_ptr.vmem [resolvable:$true] %s8
  %11 = dma.vmem_to_smem %s9, 16, [#allocation3], [#allocation2]
  %13 = dma.done [#allocation2], 16
  %14 = sfence
  $region1: #{_device_crop.3} parent=0
    #allocation4 [shape = 'u8[131072]{0}', space=vmem, size = 0x20000, scoped, tag = 'input window, operand 1']
    #allocation5 [shape = 's32[2]{0}', space=sflag, size = 0x8, scoped, tag = 'scoped memory for _device_crop.3']
    #allocation6 [shape = 's32[2]{0}', space=sflag, size = 0x8, scoped, tag = 'scoped memory for _device_crop.3']
    #allocation7 [shape = 'u8[131072]{0}', space=vmem, size = 0x20000, scoped, tag = 'output window, operand 0']
    %15 = vsyncpa [#allocation5], 0
    %s16 = scalar_lea.sflag [#allocation5], 1
    %17 = vsyncpa %s16, 0
    %18 = vsyncpa [#allocation6], 0
    %s19 = scalar_lea.sflag [#allocation6], 1
    %20 = vsyncpa %s19, 0
    loop: start=0, step=1, limit=5
    $region2: #{_device_crop.3} parent=1 // loop_pre_header
      _
    $region3: #{_device_crop.3} parent=1 // loop_header
      %s22 = sphi 0, %s26
      %p23 = scmp.ge.s32.totalorder %s22, 5
      %s32 = sphi 0, %s34
      %s35 = sphi 0, %s32
      %s36 = sphi 0, %s35
      %s52 = sphi 0, %s36
      %s58 = sphi 0, %s60
      %s61 = sphi 0, %s58
      %s62 = sphi 0, %s61
      %s78 = sphi 0, %s62
    $region4: #{_device_crop.3} parent=1 // loop_header_branch
      %25 = sbr.rel (%p23) target = $region8
    $region5: #{_device_crop.3} parent=1 // loop_body
      %s27 = ssub.s32 %s22, 1
      %s28 = ssub.s32 %s22, 2
      %s29 = sadd.s32 %s22, 1
      %s30 = ssub.s32 %s22, %s29
      %p31 = scmp.eq.s32.totalorder %s30, 0
      %s33 = sadd.s32 %s32, 1
      %s34 = scalar_select %p31, %s32, %s33
      %p37 = pneg %p31
      %p38 = scmp.eq.s32.totalorder %s22, 2
      %p39 = por %p37, %p38
      %p40 = scmp.ne.s32.totalorder %s32, %s35
      %p41 = scmp.eq.s32.totalorder %s22, 0
      %p42 = por %p40, %p41
      %p43 = scmp.ne.s32.totalorder %s32, %s35
      %p44 = scmp.eq.s32.totalorder %s27, 2
      %p45 = por %p43, %p44
      %p46 = scmp.ne.s32.totalorder %s35, %s36
      %p47 = scmp.eq.s32.totalorder %s27, 0
      %p48 = por %p46, %p47
      %p49 = scmp.ne.s32.totalorder %s35, %s36
      %p50 = scmp.eq.s32.totalorder %s28, 2
      %p51 = por %p49, %p50
      %p53 = scmp.ne.s32.totalorder %s36, %s52
      %p54 = scmp.eq.s32.totalorder %s28, 0
      %p55 = por %p53, %p54
      %s56 = ssub.s32 %s22, %s29
      %p57 = scmp.eq.s32.totalorder %s56, 0
      %s59 = sadd.s32 %s58, 1
      %s60 = scalar_select %p57, %s58, %s59
      %p63 = pneg %p57
      %p64 = scmp.eq.s32.totalorder %s22, 2
      %p65 = por %p63, %p64
      %p66 = scmp.ne.s32.totalorder %s58, %s61
      %p67 = scmp.eq.s32.totalorder %s22, 0
      %p68 = por %p66, %p67
      %p69 = scmp.ne.s32.totalorder %s58, %s61
      %p70 = scmp.eq.s32.totalorder %s27, 2
      %p71 = por %p69, %p70
      %p72 = scmp.ne.s32.totalorder %s61, %s62
      %p73 = scmp.eq.s32.totalorder %s27, 0
      %p74 = por %p72, %p73
      %p75 = scmp.ne.s32.totalorder %s61, %s62
      %p76 = scmp.eq.s32.totalorder %s28, 2
      %p77 = por %p75, %p76
      %p79 = scmp.ne.s32.totalorder %s62, %s78
      %p80 = scmp.eq.s32.totalorder %s28, 0
      %p81 = por %p79, %p80
      %p82 = scmp.le.s32.totalorder 1, %s22
      %p83 = scmp.lt.s32.totalorder %s22, 4
      %p84 = pnand %p82, %p83
      %p85 = pneg %p84
      // Predicated region
      $region9: #{_device_crop.3} parent=5 // pred_check
        _
      $region10: #{_device_crop.3} parent=5 // pred_check_branch
        %87 = sbr.rel (%p84) target = $region12
      $region11: #{_device_crop.3} parent=5 // pred_region
        %s88 = ssub.s32 %s22, 1
      $region12: #{_device_crop.3} parent=5 // pred_fallthru
        _
      %p89 = scmp.lt.s32.totalorder %s22, 3
      // Predicated region
      $region13: #{_device_crop.3} parent=5 // pred_check
        %p90 = pneg %p89
      $region14: #{_device_crop.3} parent=5 // pred_check_branch
        %92 = sbr.rel (%p90) target = $region16
      $region15: #{_device_crop.3} parent=5 // pred_region
        // Predicated region
        $region17: #{_device_crop.3} parent=15 // pred_check
          %p93 = pneg %p42
        $region18: #{_device_crop.3} parent=15 // pred_check_branch
          %95 = sbr.rel (%p93) target = $region20
        $region19: #{_device_crop.3} parent=15 // pred_region
          %s96 = sand.u32 %s32, 1
          %s97 = scalar_lea.sflag [#allocation5], %s96
          %s98 = sand.u32 %s32, 1
          %s99 = smul.addr %s98, 128
          %s100 = scalar_lea.vmem [#allocation4], %s99
          %102 = vsyncadd %s97, 0
          %s103 = smul.addr %s22, 16
          %s104 = smul.addr %s103, 8
          %s105 = scalar_lea.hbm %s1, %s104
          %s106 = sshll.u32 %s105, 4
          %s107 = int_to_ptr.hbm [resolvable:$true] %s106
          %s108 = sshll.u32 %s100, 4
          %s109 = int_to_ptr.vmem [resolvable:$true] %s108
          %114 = dma.hbm_to_vmem [thread:$0]  %s107, 2048, %s109, %s97, 128, 128, 8
        $region20: #{_device_crop.3} parent=15 // pred_fallthru
          _
      $region16: #{_device_crop.3} parent=5 // pred_fallthru
        _
      %p115 = scmp.le.s32.totalorder 1, %s22
      %p116 = scmp.lt.s32.totalorder %s22, 4
      %p117 = pnand %p115, %p116
      %p118 = pneg %p117
      // Predicated region
      $region21: #{_device_crop.3} parent=5 // pred_check
        _
      $region22: #{_device_crop.3} parent=5 // pred_check_branch
        %120 = sbr.rel (%p117) target = $region24
      $region23: #{_device_crop.3} parent=5 // pred_region
        %s121 = ssub.s32 %s22, 1
        %s122 = sand.u32 %s35, 1
        %s123 = scalar_lea.sflag [#allocation5], %s122
        %s124 = sand.u32 %s35, 1
        %s125 = smul.addr %s124, 128
        %s126 = scalar_lea.vmem [#allocation4], %s125
        // Predicated region
        $region25: #{_device_crop.3} parent=23 // pred_check
          %p127 = pneg %p48
        $region26: #{_device_crop.3} parent=23 // pred_check_branch
          %129 = sbr.rel (%p127) target = $region28
        $region27: #{_device_crop.3} parent=23 // pred_region
          %131 = dma.done %s123, 2048
        $region28: #{_device_crop.3} parent=23 // pred_fallthru
          _
        %s132 = sand.u32 %s35, 1
        %s133 = scalar_lea.sflag [#allocation5], %s132
        %s134 = sand.u32 %s35, 1
        %s135 = smul.addr %s134, 128
        %s136 = scalar_lea.vmem [#allocation4], %s135
        %p137 = pneg %p48
        %p138 = pneg %p45
        %p139 = pneg %p74
        %p140 = pneg %p71
        %s141 = sand.u32 %s61, 1
        %s142 = scalar_lea.sflag [#allocation6], %s141
        %s143 = sand.u32 %s61, 1
        %s144 = smul.addr %s143, 128
        %s145 = scalar_lea.vmem [#allocation7], %s144
        %s146 = sld [smem:[#allocation3]]
        %s147 = sld [smem:[#allocation3 + $0x1]]
        %s148 = sld [smem:[#allocation3 + $0x2]]
        %s149 = sld [smem:[#allocation3 + $0x3]]
        %v150 = vld [vmem:[%s126] sm:$0xff]
        %v151 = vld [vmem:[%s126 + $0x8] sm:$0xff]
        %v152 = vld [vmem:[%s126 + $0x10] sm:$0xff]
        %v153 = vld [vmem:[%s126 + $0x18] sm:$0xff]
        %v154 = vld [vmem:[%s126 + $0x20] sm:$0xff]
        %v155 = vld [vmem:[%s126 + $0x28] sm:$0xff]
        %v156 = vld [vmem:[%s126 + $0x30] sm:$0xff]
        %v157 = vld [vmem:[%s126 + $0x38] sm:$0xff]
        %v158 = vld [vmem:[%s126 + $0x40] sm:$0xff]
        %v159 = vld [vmem:[%s126 + $0x48] sm:$0xff]
        %v160 = vld [vmem:[%s126 + $0x50] sm:$0xff]
        %v161 = vld [vmem:[%s126 + $0x58] sm:$0xff]
        %v162 = vld [vmem:[%s126 + $0x60] sm:$0xff]
        %v163 = vld [vmem:[%s126 + $0x68] sm:$0xff]
        %v164 = vld [vmem:[%s126 + $0x70] sm:$0xff]
        %v165 = vld [vmem:[%s126 + $0x78] sm:$0xff]
        %s166 = ssub.s32 128, %s146
        %p167 = scmp.lt.s32.totalorder %s166, 0
        %s168 = ssub.s32 0, %s166
        %s169 = scalar_select %p167, %s168, %s166
        %s170 = sand.u32 %s169, 127
        %s171 = ssub.s32 0, %s170
        %s172 = scalar_select %p167, %s171, %s170
        %p173 = scmp.ne.s32.totalorder %s172, 0
        %p174 = scmp.lt.s32.totalorder %s172, 0
        %p175 = pnand %p174, %p173
        %p176 = pneg %p175
        %s177 = sadd.s32 %s172, 128
        %s178 = scalar_select %p176, %s177, %s172
        %s179 = sand.u32 %s178, 127
        %s180 = sand.u32 %s179, 7
        %s181 = sshrl.u32 %s179, 3
        %s182 = ssub.s32 8, %s180
        %v183 = vstv %s182
        %v184 = vrot.slane %v150, %v183
        %v185 = vstv %s182
        %v186 = vrot.slane %v151, %v185
        %v187 = vstv %s182
        %v188 = vrot.slane %v152, %v187
        %v189 = vstv %s182
        %v190 = vrot.slane %v153, %v189
        %v191 = vstv %s182
        %v192 = vrot.slane %v154, %v191
        %v193 = vstv %s182
        %v194 = vrot.slane %v155, %v193
        %v195 = vstv %s182
        %v196 = vrot.slane %v156, %v195
        %v197 = vstv %s182
        %v198 = vrot.slane %v157, %v197
        %v199 = vstv %s182
        %v200 = vrot.slane %v158, %v199
        %v201 = vstv %s182
        %v202 = vrot.slane %v159, %v201
        %v203 = vstv %s182
        %v204 = vrot.slane %v160, %v203
        %v205 = vstv %s182
        %v206 = vrot.slane %v161, %v205
        %v207 = vstv %s182
        %v208 = vrot.slane %v162, %v207
        %v209 = vstv %s182
        %v210 = vrot.slane %v163, %v209
        %v211 = vstv %s182
        %v212 = vrot.slane %v164, %v211
        %v213 = vstv %s182
        %v214 = vrot.slane %v165, %v213
        %v215 = vstv %s180
        %v216 = vlaneseq
        %v217 = vshrl.u32 %v216, 7
        %vm218 = vcmp.lt.s32.totalorder %v217, %v215
        %v219 = vsel %vm218, %v212, %v214
        %v220 = vsel %vm218, %v210, %v212
        %v221 = vsel %vm218, %v208, %v210
        %v222 = vsel %vm218, %v206, %v208
        %v223 = vsel %vm218, %v204, %v206
        %v224 = vsel %vm218, %v202, %v204
        %v225 = vsel %vm218, %v200, %v202
        %v226 = vsel %vm218, %v198, %v200
        %v227 = vsel %vm218, %v196, %v198
        %v228 = vsel %vm218, %v194, %v196
        %v229 = vsel %vm218, %v192, %v194
        %v230 = vsel %vm218, %v190, %v192
        %v231 = vsel %vm218, %v188, %v190
        %v232 = vsel %vm218, %v186, %v188
        %v233 = vsel %vm218, %v184, %v186
        %v234 = vsel %vm218, %v214, %v184
        %s235 = sand.u32 %s181, 1
        %v236 = vstv %s235
        %vm237 = vcmp.ne.s32.totalorder %v236, 0
        %v238 = vsel %vm237, %v219, %v234
        %v239 = vsel %vm237, %v234, %v233
        %v240 = vsel %vm237, %v233, %v232
        %v241 = vsel %vm237, %v232, %v231
        %v242 = vsel %vm237, %v231, %v230
        %v243 = vsel %vm237, %v230, %v229
        %v244 = vsel %vm237, %v229, %v228
        %v245 = vsel %vm237, %v228, %v227
        %v246 = vsel %vm237, %v227, %v226
        %v247 = vsel %vm237, %v226, %v225
        %v248 = vsel %vm237, %v225, %v224
        %v249 = vsel %vm237, %v224, %v223
        %v250 = vsel %vm237, %v223, %v222
        %v251 = vsel %vm237, %v222, %v221
        %v252 = vsel %vm237, %v221, %v220
        %v253 = vsel %vm237, %v220, %v219
        %s254 = sand.u32 %s181, 2
        %v255 = vstv %s254
        %vm256 = vcmp.ne.s32.totalorder %v255, 0
        %v257 = vsel %vm256, %v252, %v238
        %v258 = vsel %vm256, %v253, %v239
        %v259 = vsel %vm256, %v238, %v240
        %v260 = vsel %vm256, %v239, %v241
        %v261 = vsel %vm256, %v240, %v242
        %v262 = vsel %vm256, %v241, %v243
        %v263 = vsel %vm256, %v242, %v244
        %v264 = vsel %vm256, %v243, %v245
        %v265 = vsel %vm256, %v244, %v246
        %v266 = vsel %vm256, %v245, %v247
        %v267 = vsel %vm256, %v246, %v248
        %v268 = vsel %vm256, %v247, %v249
        %v269 = vsel %vm256, %v248, %v250
        %v270 = vsel %vm256, %v249, %v251
        %v271 = vsel %vm256, %v250, %v252
        %v272 = vsel %vm256, %v251, %v253
        %s273 = sand.u32 %s181, 4
        %v274 = vstv %s273
        %vm275 = vcmp.ne.s32.totalorder %v274, 0
        %v276 = vsel %vm275, %v269, %v257
        %v277 = vsel %vm275, %v270, %v258
        %v278 = vsel %vm275, %v271, %v259
        %v279 = vsel %vm275, %v272, %v260
        %v280 = vsel %vm275, %v257, %v261
        %v281 = vsel %vm275, %v258, %v262
        %v282 = vsel %vm275, %v259, %v263
        %v283 = vsel %vm275, %v260, %v264
        %v284 = vsel %vm275, %v261, %v265
        %v285 = vsel %vm275, %v262, %v266
        %v286 = vsel %vm275, %v263, %v267
        %v287 = vsel %vm275, %v264, %v268
        %v288 = vsel %vm275, %v265, %v269
        %v289 = vsel %vm275, %v266, %v270
        %v290 = vsel %vm275, %v267, %v271
        %v291 = vsel %vm275, %v268, %v272
        %s292 = sand.u32 %s181, 8
        %v293 = vstv %s292
        %vm294 = vcmp.ne.s32.totalorder %v293, 0
        %v295 = vsel %vm294, %v284, %v276
        %v296 = vsel %vm294, %v285, %v277
        %v297 = vsel %vm294, %v286, %v278
        %v298 = vsel %vm294, %v287, %v279
        %v299 = vsel %vm294, %v288, %v280
        %v300 = vsel %vm294, %v289, %v281
        %v301 = vsel %vm294, %v290, %v282
        %v302 = vsel %vm294, %v291, %v283
        %v303 = vsel %vm294, %v276, %v284
        %v304 = vsel %vm294, %v277, %v285
        %v305 = vsel %vm294, %v278, %v286
        %v306 = vsel %vm294, %v279, %v287
        %v307 = vsel %vm294, %v280, %v288
        %v308 = vsel %vm294, %v281, %v289
        %v309 = vsel %vm294, %v282, %v290
        %v310 = vsel %vm294, %v283, %v291
        %s311 = ssub.s32 128, %s147
        %p312 = scmp.lt.s32.totalorder %s311, 0
        %s313 = ssub.s32 0, %s311
        %s314 = scalar_select %p312, %s313, %s311
        %s315 = sand.u32 %s314, 127
        %s316 = ssub.s32 0, %s315
        %s317 = scalar_select %p312, %s316, %s315
        %p318 = scmp.ne.s32.totalorder %s317, 0
        %p319 = scmp.lt.s32.totalorder %s317, 0
        %p320 = pnand %p319, %p318
        %p321 = pneg %p320
        %s322 = sadd.s32 %s317, 128
        %s323 = scalar_select %p321, %s322, %s317
        %s324 = sand.u32 %s323, 127
        %s325 = sand.u32 %s324, 127
        %326 = vrot.lane.b32.xlu0 %v295, %s325
        %v327 = vpop.permute.xlu0 %326
        %328 = vrot.lane.b32.xlu0 %v296, %s325
        %v329 = vpop.permute.xlu0 %328
        %330 = vrot.lane.b32.xlu0 %v297, %s325
        %v331 = vpop.permute.xlu0 %330
        %332 = vrot.lane.b32.xlu0 %v298, %s325
        %v333 = vpop.permute.xlu0 %332
        %334 = vrot.lane.b32.xlu0 %v299, %s325
        %v335 = vpop.permute.xlu0 %334
        %336 = vrot.lane.b32.xlu0 %v300, %s325
        %v337 = vpop.permute.xlu0 %336
        %338 = vrot.lane.b32.xlu0 %v301, %s325
        %v339 = vpop.permute.xlu0 %338
        %340 = vrot.lane.b32.xlu0 %v302, %s325
        %v341 = vpop.permute.xlu0 %340
        %342 = vrot.lane.b32.xlu0 %v303, %s325
        %v343 = vpop.permute.xlu0 %342
        %344 = vrot.lane.b32.xlu0 %v304, %s325
        %v345 = vpop.permute.xlu0 %344
        %346 = vrot.lane.b32.xlu0 %v305, %s325
        %v347 = vpop.permute.xlu0 %346
        %348 = vrot.lane.b32.xlu0 %v306, %s325
        %v349 = vpop.permute.xlu0 %348
        %350 = vrot.lane.b32.xlu0 %v307, %s325
        %v351 = vpop.permute.xlu0 %350
        %352 = vrot.lane.b32.xlu0 %v308, %s325
        %v353 = vpop.permute.xlu0 %352
        %354 = vrot.lane.b32.xlu0 %v309, %s325
        %v355 = vpop.permute.xlu0 %354
        %356 = vrot.lane.b32.xlu0 %v310, %s325
        %v357 = vpop.permute.xlu0 %356
        %v358 = vadd.s32 %v217, 8
        %v359 = vadd.s32 %v217, 16
        %v360 = vadd.s32 %v217, 24
        %v361 = vadd.s32 %v217, 32
        %v362 = vadd.s32 %v217, 40
        %v363 = vadd.s32 %v217, 48
        %v364 = vadd.s32 %v217, 56
        %v365 = vadd.s32 %v217, 64
        %v366 = vadd.s32 %v217, 72
        %v367 = vadd.s32 %v217, 80
        %v368 = vadd.s32 %v217, 88
        %v369 = vadd.s32 %v217, 96
        %v370 = vadd.s32 %v217, 104
        %v371 = vadd.s32 %v217, 112
        %v372 = vadd.s32 %v217, 120
        %v373 = vlaneseq
        %v374 = vand.u32 %v373, 127
        %v375 = vstv %s148
        %vm376 = vcmp.lt.s32.totalorder %v217, %v375
        %vm377 = vcmp.lt.s32.totalorder %v358, %v375
        %vm378 = vcmp.lt.s32.totalorder %v359, %v375
        %vm379 = vcmp.lt.s32.totalorder %v360, %v375
        %vm380 = vcmp.lt.s32.totalorder %v361, %v375
        %vm381 = vcmp.lt.s32.totalorder %v362, %v375
        %vm382 = vcmp.lt.s32.totalorder %v363, %v375
        %vm383 = vcmp.lt.s32.totalorder %v364, %v375
        %vm384 = vcmp.lt.s32.totalorder %v365, %v375
        %vm385 = vcmp.lt.s32.totalorder %v366, %v375
        %vm386 = vcmp.lt.s32.totalorder %v367, %v375
        %vm387 = vcmp.lt.s32.totalorder %v368, %v375
        %vm388 = vcmp.lt.s32.totalorder %v369, %v375
        %vm389 = vcmp.lt.s32.totalorder %v370, %v375
        %vm390 = vcmp.lt.s32.totalorder %v371, %v375
        %vm391 = vcmp.lt.s32.totalorder %v372, %v375
        %v392 = vstv %s149
        %vm393 = vcmp.lt.s32.totalorder %v374, %v392
        %vm394 = vmand %vm376, %vm393
        %vm395 = vmand %vm377, %vm393
        %vm396 = vmand %vm378, %vm393
        %vm397 = vmand %vm379, %vm393
        %vm398 = vmand %vm380, %vm393
        %vm399 = vmand %vm381, %vm393
        %vm400 = vmand %vm382, %vm393
        %vm401 = vmand %vm383, %vm393
        %vm402 = vmand %vm384, %vm393
        %vm403 = vmand %vm385, %vm393
        %vm404 = vmand %vm386, %vm393
        %vm405 = vmand %vm387, %vm393
        %vm406 = vmand %vm388, %vm393
        %vm407 = vmand %vm389, %vm393
        %vm408 = vmand %vm390, %vm393
        %vm409 = vmand %vm391, %vm393
        %v410 = vsel %vm394, %v327, 0.0
        %v411 = vsel %vm395, %v329, 0.0
        %v412 = vsel %vm396, %v331, 0.0
        %v413 = vsel %vm397, %v333, 0.0
        %v414 = vsel %vm398, %v335, 0.0
        %v415 = vsel %vm399, %v337, 0.0
        %v416 = vsel %vm400, %v339, 0.0
        %v417 = vsel %vm401, %v341, 0.0
        %v418 = vsel %vm402, %v343, 0.0
        %v419 = vsel %vm403, %v345, 0.0
        %v420 = vsel %vm404, %v347, 0.0
        %v421 = vsel %vm405, %v349, 0.0
        %v422 = vsel %vm406, %v351, 0.0
        %v423 = vsel %vm407, %v353, 0.0
        %v424 = vsel %vm408, %v355, 0.0
        %v425 = vsel %vm409, %v357, 0.0
        %426 = vst [vmem:[%s145] sm:$0xff] %v410
        %427 = vst [vmem:[%s145 + $0x8] sm:$0xff] %v411
        %428 = vst [vmem:[%s145 + $0x10] sm:$0xff] %v412
        %429 = vst [vmem:[%s145 + $0x18] sm:$0xff] %v413
        %430 = vst [vmem:[%s145 + $0x20] sm:$0xff] %v414
        %431 = vst [vmem:[%s145 + $0x28] sm:$0xff] %v415
        %432 = vst [vmem:[%s145 + $0x30] sm:$0xff] %v416
        %433 = vst [vmem:[%s145 + $0x38] sm:$0xff] %v417
        %434 = vst [vmem:[%s145 + $0x40] sm:$0xff] %v418
        %435 = vst [vmem:[%s145 + $0x48] sm:$0xff] %v419
        %436 = vst [vmem:[%s145 + $0x50] sm:$0xff] %v420
        %437 = vst [vmem:[%s145 + $0x58] sm:$0xff] %v421
        %438 = vst [vmem:[%s145 + $0x60] sm:$0xff] %v422
        %439 = vst [vmem:[%s145 + $0x68] sm:$0xff] %v423
        %440 = vst [vmem:[%s145 + $0x70] sm:$0xff] %v424
        %441 = vst [vmem:[%s145 + $0x78] sm:$0xff] %v425
        %s442 = sand.u32 %s61, 1
        %s443 = scalar_lea.sflag [#allocation6], %s442
        %s444 = sand.u32 %s61, 1
        %s445 = smul.addr %s444, 128
        %s446 = scalar_lea.vmem [#allocation7], %s445
        // Predicated region
        $region29: #{_device_crop.3} parent=23 // pred_check
          %p447 = pneg %p71
        $region30: #{_device_crop.3} parent=23 // pred_check_branch
          %449 = sbr.rel (%p447) target = $region32
        $region31: #{_device_crop.3} parent=23 // pred_region
          %451 = vsyncadd %s443, 0
          %s452 = smul.addr %s27, 16
          %s453 = smul.addr %s452, 8
          %s454 = scalar_lea.hbm %s2, %s453
          %s455 = sshll.u32 %s446, 4
          %s456 = int_to_ptr.vmem [resolvable:$true] %s455
          %s457 = sshll.u32 %s454, 4
          %s458 = int_to_ptr.hbm [resolvable:$true] %s457
          %463 = dma.vmem_to_hbm [thread:$0]  %s456, 2048, %s458, %s443, 128, 128, 8
        $region32: #{_device_crop.3} parent=23 // pred_fallthru
          _
      $region24: #{_device_crop.3} parent=5 // pred_fallthru
        _
      %p464 = scmp.le.s32.totalorder 2, %s22
      // Predicated region
      $region33: #{_device_crop.3} parent=5 // pred_check
        %p465 = pneg %p464
      $region34: #{_device_crop.3} parent=5 // pred_check_branch
        %467 = sbr.rel (%p465) target = $region36
      $region35: #{_device_crop.3} parent=5 // pred_region
        %s468 = ssub.s32 %s22, 2
        // Predicated region
        $region37: #{_device_crop.3} parent=35 // pred_check
          %p469 = pneg %p77
        $region38: #{_device_crop.3} parent=35 // pred_check_branch
          %471 = sbr.rel (%p469) target = $region40
        $region39: #{_device_crop.3} parent=35 // pred_region
          %s472 = sand.u32 %s62, 1
          %s473 = scalar_lea.sflag [#allocation6], %s472
          %s474 = sand.u32 %s62, 1
          %s475 = smul.addr %s474, 128
          %s476 = scalar_lea.vmem [#allocation7], %s475
          %478 = dma.done %s473, 2048
        $region40: #{_device_crop.3} parent=35 // pred_fallthru
          _
      $region36: #{_device_crop.3} parent=5 // pred_fallthru
        _
    $region6: #{_device_crop.3} parent=1 // loop_footer
      %s26 = sadd.s32 1, %s22
    $region7: #{_device_crop.3} parent=1 // loop_footer_branch
      %21 = sbr.rel target = $region3
    $region8: #{_device_crop.3} parent=1 // loop_exit
      _
    %479 = vsyncpa [#allocation5], 1
    %s480 = scalar_lea.sflag [#allocation5], 1
    %481 = vsyncpa %s480, 1
    %482 = vsyncpa [#allocation6], 1
    %s483 = scalar_lea.sflag [#allocation6], 1
    %484 = vsyncpa %s483, 1

// kernel: _device_crop.2
$region0: #{_device_crop.2}
  #allocation0 [shape = 'u32[]', space=smem, size = 0x4, offset = 0x4, fixed_abs, tag = 'smem constant byte address 0x4 - core index']
  #allocation1 [shape = 'u32[72,128]{1,0:T(1,128)}', space=vmem, size = 0x9000, scoped, tag = 'internal scratch']
  %s0 = inlined_call_operand.vmem [shape: f32[8,4], index: 0, kind: input, shape index: {}]
  %s1 = inlined_call_operand.vmem [shape: f32[4,128], index: 1, kind: input, shape index: {}]
  %s2 = inlined_call_operand.vmem [shape: f32[2,128], index: 2, kind: input, shape index: {}]
  %s3 = inlined_call_operand.vmem [shape: s32[1,8], index: 3, kind: output, shape index: {0}]
  %s4 = inlined_call_operand.vmem [shape: f32[8,4], index: 4, kind: output, shape index: {1}]
  %5 = xla_tuple %s3, %s4
  %s6 = sld [smem:[#allocation0]]
  $region30: #{_device_crop.2} parent=0
    _
  %s8 = ssub.s32 1, %s6
  %s9 = scalar_select 0, %s8, %s6
  // Predicated region
  $region2: #{_device_crop.2} parent=0 // pred_check
    _
  $region3: #{_device_crop.2} parent=0 // pred_check_branch
    %11 = sbr.rel (0) target = $region5
  $region4: #{_device_crop.2} parent=0 // pred_region
    _
  $region5: #{_device_crop.2} parent=0 // pred_fallthru
    _
  // Predicated region
  $region6: #{_device_crop.2} parent=0 // pred_check
    _
  $region7: #{_device_crop.2} parent=0 // pred_check_branch
    %13 = sbr.rel (0) target = $region9
  $region8: #{_device_crop.2} parent=0 // pred_region
    _
  $region9: #{_device_crop.2} parent=0 // pred_fallthru
    _
  // Predicated region
  $region10: #{_device_crop.2} parent=0 // pred_check
    _
  $region11: #{_device_crop.2} parent=0 // pred_check_branch
    %15 = sbr.rel (0) target = $region13
  $region12: #{_device_crop.2} parent=0 // pred_region
    _
  $region13: #{_device_crop.2} parent=0 // pred_fallthru
    _
  %v16 = vld [vmem:[%s0] sm:$0xff]
  %v17 = vld [vmem:[%s1] sm:$0xf]
  %19 = vrot.lane.b32.xlu0 %v16, 126
  %v20 = vpop.permute.xlu0 %19
  %v22 = vadd.f32 %v16, %v20
  %v23 = vmul.f32 %v22, 0.5
  %v24 = vperm.slane %v17, 0
  %26 = vset.pattern.permute.xlu0 0
  %27 = vperm.xlu0 %26, %v23
  %v28 = vpop.permute.xlu0 %27
  %vm30 = vcmp.lt.f32.partialorder %v24, %v28
  %v31 = vperm.slane %v17, 2
  %vm32 = vcmp.lt.f32.partialorder %v28, %v31
  %vm33 = vmand %vm30, %vm32
  %v34 = vperm.slane %v17, 1
  %35 = vset.pattern.permute.xlu0 1
  %36 = vperm.xlu0 %35, %v23
  %v37 = vpop.permute.xlu0 %36
  %vm39 = vcmp.lt.f32.partialorder %v34, %v37
  %vm40 = vmand %vm33, %vm39
  %v41 = vperm.slane %v17, 3
  %vm42 = vcmp.lt.f32.partialorder %v37, %v41
  %vm43 = vmand %vm40, %vm42
  %44 = vset.pattern.permute.xlu0 0
  %45 = vperm.xlu0 %44, %v16
  %v46 = vpop.permute.xlu0 %45
  %v48 = vmax.f32 %v46, %v24
  %49 = vset.pattern.permute.xlu0 1
  %50 = vperm.xlu0 %49, %v16
  %v51 = vpop.permute.xlu0 %50
  %v53 = vmax.f32 %v51, %v34
  %54 = vset.pattern.permute.xlu0 2
  %55 = vperm.xlu0 %54, %v16
  %v56 = vpop.permute.xlu0 %55
  %v58 = vmin.f32 %v56, %v31
  %59 = vset.pattern.permute.xlu0 3
  %60 = vperm.xlu0 %59, %v16
  %v61 = vpop.permute.xlu0 %60
  %v63 = vmin.f32 %v61, %v41
  %v64 = vsub.f32 %v58, %v48
  %v65 = vmax.f32 %v64, 0.0
  %v66 = vsub.f32 %v63, %v53
  %v67 = vmax.f32 %v66, 0.0
  %v68 = vmul.f32 %v65, %v67
  %69 = vrot.lane.b32.xlu0 %v16, 2
  %v70 = vpop.permute.xlu0 %69
  %v72 = vsub.f32 %v16, %v70
  %74 = vrot.lane.b32.xlu0 %v72, 127
  %v75 = vpop.permute.xlu0 %74
  %v77 = vmul.f32 %v72, %v75
  %v79 = vrot.slane %v17, 6
  %v81 = vsub.f32 %v17, %v79
  %v83 = vrot.slane %v81, 1
  %v85 = vmul.f32 %v81, %v83
  %87 = vset.pattern.permute.xlu0 2
  %88 = vperm.xlu0 %87, %v77
  %v89 = vpop.permute.xlu0 %88
  %v91 = vperm.slane %v85, 2
  %v92 = vadd.f32 %v89, %v91
  %v93 = vsub.f32 %v92, %v68
  %v94 = vrcp.pop %v93
  %v95 = vmul.f32 %v93, %v94
  %v96 = vsub.f32 1.0, %v95
  %v97 = vmul.f32 %v94, %v96
  %v98 = vadd.f32 %v94, %v97
  %vm99 = vweird.f32 %v93
  %vm100 = vweird.f32 %v94
  %vm101 = vmor %vm99, %vm100
  %v102 = vsel %vm101, %v94, %v98
  %v103 = vand.u32 2147483647, %v93
  %vm104 = vcmp.eq.f32.partialorder %v103, 8.507059e+37
  %v105 = vand.u32 %v93, 2147483648
  %v106 = vor.u32 1.1754944e-38, %v105
  %v107 = vsel %vm104, %v106, %v102
  %v108 = vmul.f32 %v68, %v107
  %v109 = vsel %vm43, 1, 0
  %v110 = vcvt.s32.f32 %v109
  %v111 = vrot.slane %v110, 4
  %v112 = vmax.f32 %v110, %v111
  %v113 = vrot.slane %v112, 2
  %v114 = vmax.f32 %v112, %v113
  %v115 = vrot.slane %v114, 1
  %v116 = vmax.f32 %v114, %v115
  %v117 = vsel %vm43, %v108, -1.0
  %v118 = vrot.slane %v117, 4
  %v119 = vmax.f32 %v117, %v118
  %v120 = vrot.slane %v119, 2
  %v121 = vmax.f32 %v119, %v120
  %v122 = vrot.slane %v121, 1
  %v123 = vmax.f32 %v121, %v122
  %v124 = vld [vmem:[%s2] sm:$0x1]
  %v125 = vld [vmem:[%s2 + $0x1] sm:$0x1]
  %vm126 = vcmp.gt.f32.partialorder %v124, 0.0
  %vm127 = vcmp.gt.f32.partialorder %v116, 0.0
  %vm128 = vmand %vm126, %vm127
  %130 = vset.pattern.permute.xlu0 0
  %131 = vperm.xlu0 %130, %v125
  %v132 = vpop.permute.xlu0 %131
  %vm134 = vcmp.ge.f32.partialorder %v123, %v132
  %vm135 = vmand %vm128, %vm134
  %v136 = vlaneseq
  %v137 = vand.u32 %v136, 127
  %v138 = vsel %vm135, %v137, 128
  %vm139 = vcmask 1040384
  %v140 = vsel %vm139, %v138, 2147483647
  %v141 = vand.u32 %v140, 65535
  %v142 = vshra.s32 %v140, 16
  %v143 = vcvt.s32.f32 %v141
  %v144 = vcvt.s32.f32 %v142
  %145 = vmin.xlane.f32.xlu0 %v144
  %v146 = vpop.xlane.xlu0 %145
  %vm147 = vcmp.eq.f32.partialorder %v144, %v146
  %v148 = vsel %vm147, %v143, inf
  %149 = vmin.xlane.f32.xlu0 %v148
  %v150 = vpop.xlane.xlu0 %149
  %v151 = vcvt.f32.s32 %v150
  %v152 = vcvt.f32.s32 %v146
  %v153 = vshll.u32 %v152, 16
  %v154 = vadd.s32 %v153, %v151
  %vm155 = vcmp.lt.s32.totalorder %v154, 128
  %vm156 = vcmp.eq.s32.totalorder %v137, %v154
  %v157 = vsel %vm156, 1, 0
  %v158 = vperm.slane %v157, 0
  %vm159 = vcmp.eq.s32.totalorder %v158, 1
  %v160 = vsel %vm159, %v17, 0.0
  %vm161 = vcmask 1043456
  %v162 = vsel %vm161, %v160, 0.0
  %163 = vadd.xlane.f32.xlu0 %v162
  %v164 = vpop.xlane.xlu0 %163
  %v166 = vrot.slane %v164, 1
  %v168 = vsel %vm155, %v166, 0.0
  %v169 = vsel %vm155, %v164, 0.0
  %v170 = vrot.slane %v164, 6
  %v172 = vsub.f32 %v164, %v170
  %v174 = vrot.slane %v172, 3
  %v176 = vsel %vm155, %v174, 128.0
  %v177 = vrot.slane %v172, 2
  %v179 = vsel %vm155, %v177, 128.0
  %v180 = vsel %vm155, 1, 0
  %v181 = vcvt.s32.f32 %v180
  %vm182 = vcmp.eq.s32.totalorder %v137, 0
  %184 = vset.pattern.permute.xlu0 0
  %185 = vperm.xlu0 %184, %v168
  %v186 = vpop.permute.xlu0 %185
  %v188 = vsel %vm182, %v186, 0.0
  %vm189 = vcmp.eq.s32.totalorder %v137, 1
  %v190 = vsel %vm189, %v169, 0.0
  %v191 = vadd.f32 %v188, %v190
  %vm192 = vcmp.eq.s32.totalorder %v137, 2
  %194 = vset.pattern.permute.xlu0 0
  %195 = vperm.xlu0 %194, %v176
  %v196 = vpop.permute.xlu0 %195
  %v198 = vsel %vm192, %v196, 0.0
  %v199 = vadd.f32 %v191, %v198
  %vm200 = vcmp.eq.s32.totalorder %v137, 3
  %202 = vset.pattern.permute.xlu0 0
  %203 = vperm.xlu0 %202, %v179
  %v204 = vpop.permute.xlu0 %203
  %v206 = vsel %vm200, %v204, 0.0
  %v207 = vadd.f32 %v199, %v206
  %vm208 = vcmp.eq.s32.totalorder %v137, 4
  %v209 = vsel %vm208, %v181, 0.0
  %v210 = vadd.f32 %v207, %v209
  %v211 = vcvt.f32.s32.to.zero.pseudo %v210
  %vm212 = vcmask 57344
  %213 = vst.msk [vmem:[%s3] sm:$0x1] %vm212, %v211
  %v214 = vadd.f32 %v169, %v179
  %v215 = vadd.f32 %v168, %v176
  %v216 = vperm.slane %v169, 0
  %vm217 = vcmp.lt.f32.partialorder %v216, %v23
  %v218 = vperm.slane %v214, 0
  %vm219 = vcmp.lt.f32.partialorder %v23, %v218
  %vm220 = vmand %vm217, %vm219
  %v221 = vperm.slane %v168, 0
  %222 = vrot.lane.b32.xlu0 %v23, 127
  %v223 = vpop.permute.xlu0 %222
  %vm225 = vcmp.lt.f32.partialorder %v221, %v223
  %vm226 = vmand %vm220, %vm225
  %v227 = vperm.slane %v215, 0
  %229 = vrot.lane.b32.xlu0 %v227, 1
  %v230 = vpop.permute.xlu0 %229
  %vm232 = vcmp.lt.f32.partialorder %v23, %v230
  %v233 = vsel %vm232, 1, 0
  %234 = vrot.lane.b32.xlu0 %v233, 127
  %v235 = vpop.permute.xlu0 %234
  %vm236 = vcmp.ne.s32.totalorder %v235, 0
  %vm237 = vmand %vm226, %vm236
  %vm238 = vcmp.lt.s32.totalorder %v137, 0
  %v239 = vsub.s32 0, %v137
  %v240 = vsel %vm238, %v239, %v137
  %v241 = vshrl.u32 %v240, 1
  %v242 = vand.u32 %v240, 1
  %v243 = vsub.s32 0, %v242
  %v244 = vsel %vm238, %v243, %v242
  %vm245 = vcmp.ne.s32.totalorder %v244, 0
  %vm246 = vcmp.lt.s32.totalorder %v244, 0
  %vm247 = vmand %vm246, %vm245
  %v248 = vadd.s32 %v244, 2
  %v249 = vsel %vm247, %v248, %v244
  %vm250 = vcmp.eq.s32.totalorder %v249, 0
  %s251 = vtos %v168
  %v252 = vstv %s251
  %v254 = vsel %vm250, %v216, %v252
  %s255 = vtos %v179
  %v256 = vstv %s255
  %s258 = vtos %v176
  %v259 = vstv %s258
  %v261 = vsel %vm250, %v256, %v259
  %v262 = vsub.f32 %v16, %v254
  %v263 = vmax.f32 %v262, 0.0
  %v264 = vmin.f32 %v261, %v263
  %v265 = vsel %vm237, 1, 0
  %266 = vset.pattern.permute.xlu0 0
  %267 = vperm.xlu0 %266, %v265
  %v268 = vpop.permute.xlu0 %267
  %vm269 = vcmp.eq.s32.totalorder %v268, 1
  %v270 = vsel %vm269, %v264, 0.0
  %vm271 = vcmp.gt.f32.partialorder %v181, 0.0
  %v272 = vsel %vm271, 1, 0
  %v273 = vperm.slane %v272, 0
  %vm274 = vcmp.eq.s32.totalorder %v273, 1
  %v275 = vsel %vm274, %v270, %v16
  %vm276 = vcmask 31744
  %277 = vst.msk [vmem:[%s4] sm:$0xff] %vm276, %v275
  // Predicated region
  $region14: #{_device_crop.2} parent=0 // pred_check
    _
  $region15: #{_device_crop.2} parent=0 // pred_check_branch
    %279 = sbr.rel (0) target = $region17
  $region16: #{_device_crop.2} parent=0 // pred_region
    _
  $region17: #{_device_crop.2} parent=0 // pred_fallthru
    _
  // Predicated region
  $region18: #{_device_crop.2} parent=0 // pred_check
    _
  $region19: #{_device_crop.2} parent=0 // pred_check_branch
    %281 = sbr.rel (0) target = $region21
  $region20: #{_device_crop.2} parent=0 // pred_region
    _
  $region21: #{_device_crop.2} parent=0 // pred_fallthru
    _
  // Predicated region
  $region22: #{_device_crop.2} parent=0 // pred_check
    _
  $region23: #{_device_crop.2} parent=0 // pred_check_branch
    %283 = sbr.rel (0) target = $region25
  $region24: #{_device_crop.2} parent=0 // pred_region
    _
  $region25: #{_device_crop.2} parent=0 // pred_fallthru
    _
  // Predicated region
  $region26: #{_device_crop.2} parent=0 // pred_check
    _
  $region27: #{_device_crop.2} parent=0 // pred_check_branch
    %285 = sbr.rel (0) target = $region29
  $region28: #{_device_crop.2} parent=0 // pred_region
    _
  $region29: #{_device_crop.2} parent=0 // pred_fallthru
    _

</llo_original>
